<compile_context>
chip_gen: v6e
topology: v6e:2x2x1
jax: 0.10.0
libtpu: 0.0.40
codegen_flags: <defaults>
</compile_context>

<pallas_src>
from functools import partial

import jax
import jax.numpy as jnp
from jax.experimental import pallas as pl
from jax.experimental.pallas import tpu as pltpu

LEAKY_SLOPE = 0.01   # nn.LeakyReLU default
BN_EPS = 1e-5        # nn.BatchNorm default


def _lrelu(h):
    return jnp.where(h > 0, h, LEAKY_SLOPE * h)


# --------------------------------------------------------------------------
# Pallas kernels
# --------------------------------------------------------------------------
def _knn_kernel(xt_ref, x_ref, idx_ref, *, k):
    """Fused pairwise (negated) squared distances + k-NN index extraction for
    one (point-row-tile, batch) grid cell; the dense distance row block never
    leaves VMEM."""
    xt = xt_ref[0]                                   # (TD, Fin) f32
    xf = x_ref[0]                                    # (Fin, N)  f32
    td, n = xt.shape[0], xf.shape[1]
    gram = jnp.dot(xt, xf, preferred_element_type=jnp.float32)
    sq_row = jnp.sum(xt * xt, axis=1, keepdims=True)
    sq_col = jnp.sum(xf * xf, axis=0, keepdims=True)
    neg = 2.0 * gram - sq_row - sq_col               # = -||xi - xj||^2 (bigger = nearer)
    col = jax.lax.broadcasted_iota(jnp.int32, (td, n), 1)
    picks = []
    for j in range(k + 1):                           # slot 0 = the zero-distance self match
        m = jnp.max(neg, axis=1, keepdims=True)
        pick = jnp.min(jnp.where(neg >= m, col, n), axis=1, keepdims=True)
        if j > 0:
            picks.append(pick)                       # drop the self index, keep k neighbours
        if j < k:
            neg = jnp.where(col == pick, -3.0e38, neg)
    idx_ref[0] = jnp.concatenate(picks, axis=1)      # (TD, k) int32


def _edge_kernel(df_ref, dx_ref, cf_ref, cp_ref,
                 wfc_ref, wfd_ref, afea_ref, bfea_ref,
                 wxc_ref, wxd_ref, axyz_ref, bxyz_ref,
                 wa1_ref, aa1_ref, ba1_ref,
                 wa2_ref, aa2_ref, ba2_ref,
                 wkc_ref, wkd_ref, ak_ref, bk_ref,
                 w2c_ref, w2d_ref, w2i_ref, a2_ref, b2_ref,
                 auc_ref, buc_ref,
                 out_ref):
    """bilateral_upsample_edgeConv (+ bn_uc + LeakyReLU) for one (point-tile, batch)."""
    f32, bf16 = jnp.float32, jnp.bfloat16

    df = df_ref[0]                     # (k, TN, Fin)  bf16, neighbour-major diffs
    dx = dx_ref[0]                     # (k, TN, 3)    bf16
    cf = cf_ref[0]                     # (TN, Fin)     bf16 centre features
    cp = cp_ref[0]                     # (TN, 3)       bf16 centre coords
    k, tn, fin = df.shape
    c2 = 2 * fin
    k2 = wkd_ref.shape[0]              # inte_conv window width = k//2 + 1
    ko = k - k2 + 1                    # = k // 2
    c16 = wfd_ref.shape[1]

    def dot32(a, b):
        return jnp.dot(a, b, preferred_element_type=f32)

    # ---- bilateral weights: conv_fea * conv_xyz -> conv_all -> softmax over k ----
    # centre-channel contribution is computed once per point and broadcast over k.
    wf = dot32(df.reshape(k * tn, fin), wfd_ref[...]).reshape(k, tn, c16) \
        + dot32(cf, wfc_ref[...])[None]
    wf = _lrelu(wf * afea_ref[...] + bfea_ref[...])
    wx = dot32(dx.reshape(k * tn, dx.shape[-1]), wxd_ref[...]).reshape(k, tn, c16) \
        + dot32(cp, wxc_ref[...])[None]
    wx = _lrelu(wx * axyz_ref[...] + bxyz_ref[...])
    w = (wf * wx).astype(bf16).reshape(k * tn, c16)
    w = _lrelu(dot32(w, wa1_ref[...]) * aa1_ref[...] + ba1_ref[...]).astype(bf16)
    w = _lrelu(dot32(w, wa2_ref[...]) * aa2_ref[...] + ba2_ref[...])      # (k*TN, 2Fin) f32
    w3 = w.reshape(k, tn, c2)
    w3 = w3 - jnp.max(w3, axis=0, keepdims=True)                          # per-(point, chan) max
    e3 = jnp.exp(w3)
    w_soft = e3 * pl.reciprocal(jnp.sum(e3, axis=0, keepdims=True), approx=True)

    # ---- inte_conv_hk: accumulated sliding-window matmuls (no im2col buffer) ----
    hk = None
    for s in range(k2):
        part = dot32(df[s:s + ko].reshape(ko * tn, fin), wkd_ref[s])
        hk = part if hk is None else hk + part
    hk = hk.reshape(ko, tn, 2 * c2) + dot32(cf, wkc_ref[...])[None]
    hh = _lrelu(hk * ak_ref[...] + bk_ref[...])        # (KO, TN, 4Fin), cols = [even | odd]
    he = hh[:, :, :c2]                                 # q = 0 channels -> neighbour slots [0, KO)
    ho = hh[:, :, c2:]                                 # q = 1 channels -> neighbour slots [KO, k)

    # ---- conv2 = Conv2d(2Fin, 2Fout, [1, 2k]) over cat([e_fea, inte], k-axis) ----
    # per-slot accumulation (no 2k-piece concat); centre rows pre-summed in w2c.
    y = dot32(cf, w2c_ref[...])                        # (TN, 2Fout)
    for t in range(k):
        y = y + dot32(df[t], w2d_ref[t])
        it = (he[t] if t < ko else ho[t - ko]) * w_soft[t]
        y = y + dot32(it.astype(bf16), w2i_ref[t])
    y = jnp.maximum(y * a2_ref[...] + b2_ref[...], 0.0)    # conv2 bias + BN2d + ReLU
    y = _lrelu(y * auc_ref[...] + buc_ref[...])            # folded bn_uc + LeakyReLU
    out_ref[0] = y.T                                       # lane-dense (2Fout, TN) store


# --------------------------------------------------------------------------
# Parameter initialization (deterministic, inference-mode BatchNorm stats)
# --------------------------------------------------------------------------
def _init_bn(key, c):
    k1, k2, k3, k4 = jax.random.split(key, 4)
    gamma = 1.0 + 0.05 * jax.random.normal(k1, (c,), jnp.float32)
    beta = 0.05 * jax.random.normal(k2, (c,), jnp.float32)
    mean = 0.05 * jax.random.normal(k3, (c,), jnp.float32)
    var = 1.0 + 0.1 * jnp.abs(jax.random.normal(k4, (c,), jnp.float32))
    return gamma, beta, mean, var


def init_params(key, Fin, Fout, k):
    K2 = k // 2 + 1
    keys = iter(jax.random.split(key, 64))

    def nxt():
        return next(keys)

    def w(shape, s=0.1):
        return s * jax.random.normal(nxt(), shape, jnp.float32)

    p = {}
    p['w_fea'] = w((16, 2 * Fin));            p['b_fea'] = w((16,));         p['bn_fea'] = _init_bn(nxt(), 16)
    p['w_xyz'] = w((16, 6));                  p['b_xyz'] = w((16,));         p['bn_xyz'] = _init_bn(nxt(), 16)
    p['w_all1'] = w((64, 16));                p['b_all1'] = w((64,));        p['bn_all1'] = _init_bn(nxt(), 64)
    p['w_all2'] = w((2 * Fin, 64));           p['b_all2'] = w((2 * Fin,));   p['bn_all2'] = _init_bn(nxt(), 2 * Fin)
    p['w_k'] = w((4 * Fin, 2 * Fin, K2));     p['b_k'] = w((4 * Fin,));      p['bn_k'] = _init_bn(nxt(), 4 * Fin)
    p['w_2'] = w((2 * Fout, 2 * Fin, 2 * k)); p['b_2'] = w((2 * Fout,));     p['bn_2'] = _init_bn(nxt(), 2 * Fout)
    p['bn_uc'] = _init_bn(nxt(), Fout)
    p['w_fc1'] = w((Fin, Fin));               p['b_fc1'] = w((Fin,));        p['bn_fc1'] = _init_bn(nxt(), Fin)
    p['w_fc2'] = w((Fout, Fin));              p['b_fc2'] = w((Fout,));       p['bn_fc2'] = _init_bn(nxt(), Fout)
    p['w_g'] = w((512, Fout));                p['b_g'] = w((512,));          p['bn_g'] = _init_bn(nxt(), 512)
    return p


def _fold(bn, bias=None):
    gamma, beta, mean, var = bn
    scale = gamma / jnp.sqrt(var + BN_EPS)
    shift = beta - mean * scale
    if bias is not None:
        shift = shift + bias * scale
    return scale, shift


def _row(v):
    return v.reshape(1, -1).astype(jnp.float32)


def _pick_tile(n, cap):
    """Largest 128-aligned tile <= cap that divides n (else the full n)."""
    if n <= cap:
        return n
    t = (cap // 128) * 128
    while t >= 128:
        if n % t == 0:
            return t
        t -= 128
    return n


# --------------------------------------------------------------------------
# Forward pass
# --------------------------------------------------------------------------
def bilateral_block_l3_forward(params, x, pc, Fout, num_k, maxpool):
    B, Fin, N = x.shape
    assert maxpool == N, "maxpool kernel must span the point dimension (as in the torch module)"
    k = num_k // 2
    assert k >= 2 and k % 2 == 0 and k + 1 <= N
    K2 = params['w_k'].shape[2]
    assert K2 == k // 2 + 1
    C2o = 2 * Fout
    f32, bf16 = jnp.float32, jnp.bfloat16

    x_t = jnp.transpose(x, (0, 2, 1))       # (B, N, Fin)
    pc_t = jnp.transpose(pc, (0, 2, 1))     # (B, N, 3)

    # ---- fused kNN: negated distances + iterative top-k, only indices hit HBM ----
    tile_d = _pick_tile(N, cap=512)
    idx = pl.pallas_call(
        partial(_knn_kernel, k=k),
        grid=(N // tile_d, B),
        in_specs=[pl.BlockSpec((1, tile_d, Fin), lambda t, b: (b, t, 0)),
                  pl.BlockSpec((1, Fin, N), lambda t, b: (b, 0, 0))],
        out_specs=pl.BlockSpec((1, tile_d, k), lambda t, b: (b, t, 0)),
        out_shape=jax.ShapeDtypeStruct((B, N, k), jnp.int32),
        compiler_params=pltpu.CompilerParams(
            dimension_semantics=("parallel", "parallel"),
            vmem_limit_bytes=48 * 1024 * 1024),
    )(x_t, x)

    # TODO(synk): the neighbour gather (torch index_select) has no clean Pallas
    # primitive; done as plain-JAX advanced indexing on the small index tensor.
    idx_t = jnp.transpose(idx, (0, 2, 1))                        # (B, k, N) int32, tiny
    nbr_f = jax.vmap(lambda a, i: a[i])(x_t, idx_t)              # (B, k, N, Fin)
    nbr_p = jax.vmap(lambda a, i: a[i])(pc_t, idx_t)             # (B, k, N, 3)
    # Only the (neighbour - centre) halves are materialized; the k-duplicated
    # centre halves are rebuilt in-kernel from per-tile centre blocks.
    dff = (nbr_f - x_t[:, None, :, :]).astype(bf16)              # (B, k, N, Fin)
    dxz = (nbr_p - pc_t[:, None, :, :]).astype(bf16)             # (B, k, N, 3)
    cenf = x_t.astype(bf16)                                      # (B, N, Fin)
    cenp = pc_t.astype(bf16)                                     # (B, N, 3)

    # ---- fold conv biases + BatchNorm into f32 per-channel scale/shift ----
    a_fea, b_fea = _fold(params['bn_fea'], params['b_fea'])
    a_xyz, b_xyz = _fold(params['bn_xyz'], params['b_xyz'])
    a_a1, b_a1 = _fold(params['bn_all1'], params['b_all1'])
    a_a2, b_a2 = _fold(params['bn_all2'], params['b_all2'])
    a_k, b_k = _fold(params['bn_k'], params['b_k'])
    a_2c, b_2c = _fold(params['bn_2'], params['b_2'])
    a_ucf, b_ucf = _fold(params['bn_uc'])
    a_uc, b_uc = jnp.repeat(a_ucf, 2), jnp.repeat(b_ucf, 2)      # conv2 channel co = 2f + p

    # e_fea / e_xyz channel order is [centre | diff] -> split the consuming
    # weights into centre rows and diff rows (bf16 for the MXU).
    wfea = params['w_fea'].T                                     # (2Fin, 16)
    wfc, wfd = wfea[:Fin].astype(bf16), wfea[Fin:].astype(bf16)
    wxyz = params['w_xyz'].T                                     # (6, 16)
    wxc, wxd = wxyz[:3].astype(bf16), wxyz[3:].astype(bf16)
    wa1 = params['w_all1'].T.astype(bf16)                        # (16, 64)
    wa2 = params['w_all2'].T.astype(bf16)                        # (64, 2Fin)

    # inte_conv_hk: per-window-offset (2Fin, 4Fin) slabs; output columns regrouped
    # [even | odd] so q=0/q=1 halves are contiguous; centre rows summed over the
    # window (the centre input is identical for every offset).
    wk_t = jnp.transpose(params['w_k'], (2, 1, 0))               # (K2, 2Fin, 4Fin)
    wk_t = jnp.concatenate([wk_t[..., 0::2], wk_t[..., 1::2]], axis=-1)
    wkc = jnp.sum(wk_t[:, :Fin, :], axis=0).astype(bf16)         # (Fin, 4Fin)
    wkd = wk_t[:, Fin:, :].astype(bf16)                          # (K2, Fin, 4Fin)
    ak_f = jnp.concatenate([a_k[0::2], a_k[1::2]])
    bk_f = jnp.concatenate([b_k[0::2], b_k[1::2]])

    # conv2: per-window-slot (2Fin, 2Fout) slabs; slots [0,k) act on e_fea
    # (centre rows pre-summed), slots [k,2k) act on the inte features.
    w2_t = jnp.transpose(params['w_2'], (2, 1, 0))               # (2k, 2Fin, 2Fout)
    w2c = jnp.sum(w2_t[:k, :Fin, :], axis=0).astype(bf16)        # (Fin, 2Fout)
    w2d = w2_t[:k, Fin:, :].astype(bf16)                         # (k, Fin, 2Fout)
    w2i = w2_t[k:, :, :].astype(bf16)                            # (k, 2Fin, 2Fout)

    weights = (wfc, wfd, _row(a_fea), _row(b_fea),
               wxc, wxd, _row(a_xyz), _row(b_xyz),
               wa1, _row(a_a1), _row(b_a1),
               wa2, _row(a_a2), _row(b_a2),
               wkc, wkd, _row(ak_f), _row(bk_f),
               w2c, w2d, w2i, _row(a_2c), _row(b_2c),
               _row(a_uc), _row(b_uc))

    tile_n = _pick_tile(N, cap=256)

    def _const(shape):
        nd = len(shape)
        return pl.BlockSpec(tuple(shape), lambda t, b, nd=nd: (0,) * nd)

    y = pl.pallas_call(
        _edge_kernel,
        grid=(N // tile_n, B),
        in_specs=[pl.BlockSpec((1, k, tile_n, Fin), lambda t, b: (b, 0, t, 0)),
                  pl.BlockSpec((1, k, tile_n, 3), lambda t, b: (b, 0, t, 0)),
                  pl.BlockSpec((1, tile_n, Fin), lambda t, b: (b, t, 0)),
                  pl.BlockSpec((1, tile_n, 3), lambda t, b: (b, t, 0))]
                 + [_const(w.shape) for w in weights],
        out_specs=pl.BlockSpec((1, C2o, tile_n), lambda t, b: (b, 0, t)),
        out_shape=jax.ShapeDtypeStruct((B, C2o, N), f32),
        compiler_params=pltpu.CompilerParams(
            dimension_semantics=("parallel", "parallel"),
            vmem_limit_bytes=48 * 1024 * 1024),
    )(dff, dxz, cenf, cenp, *weights)

    # (B, 2Fout, N), channel order co = 2f + p  ->  [B, Fout, 2N] is a free reshape
    x_ec = y.reshape(B, Fout, 2 * N)

    # ---- maxpool + fc + g_fc path: a few tiny matmuls, plain XLA ----
    a_f1, b_f1 = _fold(params['bn_fc1'], params['b_fc1'])
    a_f2, b_f2 = _fold(params['bn_fc2'], params['b_fc2'])
    a_g, b_g = _fold(params['bn_g'], params['b_g'])
    xs0 = jnp.max(x, axis=-1)                                    # MaxPool2d((1, N))
    h = _lrelu(jnp.dot(xs0, params['w_fc1'].T) * a_f1 + b_f1)
    xs = _lrelu(jnp.dot(h, params['w_fc2'].T) * a_f2 + b_f2)
    g = _lrelu(jnp.dot(xs, params['w_g'].T) * a_g + b_g)

    xs_rep = jnp.broadcast_to(xs[:, :, None], (B, Fout, 2 * N))
    g_rep = jnp.broadcast_to(g[:, :, None], (B, 512, 2 * N))
    x_out = jnp.concatenate([xs_rep, x_ec], axis=1)
    g_out = jnp.concatenate([g_rep, x_ec], axis=1)
    return x_out, g_out


# --------------------------------------------------------------------------
if __name__ == "__main__":
    B, Fin, Fout, N = 2, 4, 8, 16
    num_k = 8            # -> k = 4 inside the edge conv
    maxpool = N          # MaxPool2d((1, N)) so the fc path sees [B, Fin]

    key = jax.random.PRNGKey(0)
    kx, kp, kw = jax.random.split(key, 3)
    x = jax.random.normal(kx, (B, Fin, N), jnp.float32)
    pc = jax.random.normal(kp, (B, 3, N), jnp.float32)
    params = init_params(kw, Fin, Fout, num_k // 2)

    x_out, g_out = bilateral_block_l3_forward(params, x, pc, Fout, num_k, maxpool)
    x_out, g_out = jax.block_until_ready((x_out, g_out))

    assert x_out.shape == (B, 2 * Fout, 2 * N), x_out.shape
    assert g_out.shape == (B, 512 + Fout, 2 * N), g_out.shape
    assert bool(jnp.all(jnp.isfinite(x_out))) and bool(jnp.all(jnp.isfinite(g_out)))
    print("KERNEL_OK")
</pallas_src>

<mosaic_0001>
module attributes {stable_mosaic.version = 11 : i64} {
  func.func @_knn_kernel(%arg0: i32, %arg1: i32, %arg2: memref<1x16x4xf32, #tpu.memory_space<vmem>>, %arg3: memref<1x4x16xf32, #tpu.memory_space<vmem>>, %arg4: memref<1x16x4xi32, #tpu.memory_space<vmem>>) attributes {dimension_semantics = [#tpu.dimension_semantics<parallel>, #tpu.dimension_semantics<parallel>], iteration_bounds = array<i64: 1, 2>, scalar_prefetch = 0 : i64, scratch_operands = 0 : i64, tpu.core_type = #tpu.core_type<tc>, window_params = [{transform_indices = @transform_0, window_bounds = array<i64: 1, 16, 4>}, {transform_indices = @transform_1, window_bounds = array<i64: 1, 4, 16>}, {transform_indices = @transform_2, window_bounds = array<i64: 1, 16, 4>}]} {
    %c0 = arith.constant 0 : index
    %c0_0 = arith.constant 0 : index
    %c0_1 = arith.constant 0 : index
    %0 = vector.load %arg2[%c0, %c0_0, %c0_1] : memref<1x16x4xf32, #tpu.memory_space<vmem>>, vector<1x16x4xf32>
    %1 = vector.shape_cast %0 : vector<1x16x4xf32> to vector<16x4xf32>
    %c0_2 = arith.constant 0 : index
    %c0_3 = arith.constant 0 : index
    %c0_4 = arith.constant 0 : index
    %2 = vector.load %arg3[%c0_2, %c0_3, %c0_4] : memref<1x4x16xf32, #tpu.memory_space<vmem>>, vector<1x4x16xf32>
    %3 = vector.shape_cast %2 : vector<1x4x16xf32> to vector<4x16xf32>
    %cst = arith.constant dense<0.000000e+00> : vector<16x16xf32>
    %4 = tpu.matmul %1, %3, %cst {dimension_numbers = #tpu.dot_dimension_numbers<[1], [0], [0], [1], [0, 0, 1, 1], [], []>} : vector<16x4xf32>, vector<4x16xf32>, vector<16x16xf32> -> vector<16x16xf32>
    %5 = arith.mulf %1, %1 : vector<16x4xf32>
    %cst_5 = arith.constant dense<0.000000e+00> : vector<16xf32>
    %6 = vector.multi_reduction <add>, %5, %cst_5 [1] : vector<16x4xf32> to vector<16xf32>
    %7 = vector.shape_cast %6 : vector<16xf32> to vector<16x1xf32>
    %8 = arith.mulf %3, %3 : vector<4x16xf32>
    %cst_6 = arith.constant dense<0.000000e+00> : vector<16xf32>
    %9 = vector.multi_reduction <add>, %8, %cst_6 [0] : vector<4x16xf32> to vector<16xf32>
    %10 = vector.shape_cast %9 : vector<16xf32> to vector<1x16xf32>
    %cst_7 = arith.constant 2.000000e+00 : f32
    %11 = vector.broadcast %cst_7 : f32 to vector<16x16xf32>
    %12 = arith.mulf %11, %4 : vector<16x16xf32>
    %13 = vector.broadcast %7 : vector<16x1xf32> to vector<16x16xf32>
    %14 = arith.subf %12, %13 : vector<16x16xf32>
    %15 = vector.broadcast %10 : vector<1x16xf32> to vector<16x16xf32>
    %16 = arith.subf %14, %15 : vector<16x16xf32>
    %17 = tpu.iota {dimensions = array<i32: 1>} : vector<16x16xi32>
    %cst_8 = arith.constant dense<0xFF800000> : vector<16xf32>
    %18 = vector.multi_reduction <maximumf>, %16, %cst_8 [1] : vector<16x16xf32> to vector<16xf32>
    %19 = vector.shape_cast %18 : vector<16xf32> to vector<16x1xf32>
    %20 = vector.broadcast %19 : vector<16x1xf32> to vector<16x16xf32>
    %21 = arith.cmpf oge, %16, %20 : vector<16x16xf32>
    %c16_i32 = arith.constant 16 : i32
    %22 = vector.broadcast %c16_i32 : i32 to vector<16x16xi32>
    %23 = arith.select %21, %17, %22 : vector<16x16xi1>, vector<16x16xi32>
    %cst_9 = arith.constant dense<2147483647> : vector<16xi32>
    %24 = vector.multi_reduction <minsi>, %23, %cst_9 [1] : vector<16x16xi32> to vector<16xi32>
    %25 = vector.shape_cast %24 : vector<16xi32> to vector<16x1xi32>
    %26 = vector.broadcast %25 : vector<16x1xi32> to vector<16x16xi32>
    %27 = arith.cmpi eq, %17, %26 : vector<16x16xi32>
    %cst_10 = arith.constant -3.000000e+38 : f32
    %28 = vector.broadcast %cst_10 : f32 to vector<16x16xf32>
    %29 = arith.select %27, %28, %16 : vector<16x16xi1>, vector<16x16xf32>
    %cst_11 = arith.constant dense<0xFF800000> : vector<16xf32>
    %30 = vector.multi_reduction <maximumf>, %29, %cst_11 [1] : vector<16x16xf32> to vector<16xf32>
    %31 = vector.shape_cast %30 : vector<16xf32> to vector<16x1xf32>
    %32 = vector.broadcast %31 : vector<16x1xf32> to vector<16x16xf32>
    %33 = arith.cmpf oge, %29, %32 : vector<16x16xf32>
    %c16_i32_12 = arith.constant 16 : i32
    %34 = vector.broadcast %c16_i32_12 : i32 to vector<16x16xi32>
    %35 = arith.select %33, %17, %34 : vector<16x16xi1>, vector<16x16xi32>
    %cst_13 = arith.constant dense<2147483647> : vector<16xi32>
    %36 = vector.multi_reduction <minsi>, %35, %cst_13 [1] : vector<16x16xi32> to vector<16xi32>
    %37 = vector.shape_cast %36 : vector<16xi32> to vector<16x1xi32>
    %38 = vector.broadcast %37 : vector<16x1xi32> to vector<16x16xi32>
    %39 = arith.cmpi eq, %17, %38 : vector<16x16xi32>
    %cst_14 = arith.constant -3.000000e+38 : f32
    %40 = vector.broadcast %cst_14 : f32 to vector<16x16xf32>
    %41 = arith.select %39, %40, %29 : vector<16x16xi1>, vector<16x16xf32>
    %cst_15 = arith.constant dense<0xFF800000> : vector<16xf32>
    %42 = vector.multi_reduction <maximumf>, %41, %cst_15 [1] : vector<16x16xf32> to vector<16xf32>
    %43 = vector.shape_cast %42 : vector<16xf32> to vector<16x1xf32>
    %44 = vector.broadcast %43 : vector<16x1xf32> to vector<16x16xf32>
    %45 = arith.cmpf oge, %41, %44 : vector<16x16xf32>
    %c16_i32_16 = arith.constant 16 : i32
    %46 = vector.broadcast %c16_i32_16 : i32 to vector<16x16xi32>
    %47 = arith.select %45, %17, %46 : vector<16x16xi1>, vector<16x16xi32>
    %cst_17 = arith.constant dense<2147483647> : vector<16xi32>
    %48 = vector.multi_reduction <minsi>, %47, %cst_17 [1] : vector<16x16xi32> to vector<16xi32>
    %49 = vector.shape_cast %48 : vector<16xi32> to vector<16x1xi32>
    %50 = vector.broadcast %49 : vector<16x1xi32> to vector<16x16xi32>
    %51 = arith.cmpi eq, %17, %50 : vector<16x16xi32>
    %cst_18 = arith.constant -3.000000e+38 : f32
    %52 = vector.broadcast %cst_18 : f32 to vector<16x16xf32>
    %53 = arith.select %51, %52, %41 : vector<16x16xi1>, vector<16x16xf32>
    %cst_19 = arith.constant dense<0xFF800000> : vector<16xf32>
    %54 = vector.multi_reduction <maximumf>, %53, %cst_19 [1] : vector<16x16xf32> to vector<16xf32>
    %55 = vector.shape_cast %54 : vector<16xf32> to vector<16x1xf32>
    %56 = vector.broadcast %55 : vector<16x1xf32> to vector<16x16xf32>
    %57 = arith.cmpf oge, %53, %56 : vector<16x16xf32>
    %c16_i32_20 = arith.constant 16 : i32
    %58 = vector.broadcast %c16_i32_20 : i32 to vector<16x16xi32>
    %59 = arith.select %57, %17, %58 : vector<16x16xi1>, vector<16x16xi32>
    %cst_21 = arith.constant dense<2147483647> : vector<16xi32>
    %60 = vector.multi_reduction <minsi>, %59, %cst_21 [1] : vector<16x16xi32> to vector<16xi32>
    %61 = vector.shape_cast %60 : vector<16xi32> to vector<16x1xi32>
    %62 = vector.broadcast %61 : vector<16x1xi32> to vector<16x16xi32>
    %63 = arith.cmpi eq, %17, %62 : vector<16x16xi32>
    %cst_22 = arith.constant -3.000000e+38 : f32
    %64 = vector.broadcast %cst_22 : f32 to vector<16x16xf32>
    %65 = arith.select %63, %64, %53 : vector<16x16xi1>, vector<16x16xf32>
    %cst_23 = arith.constant dense<0xFF800000> : vector<16xf32>
    %66 = vector.multi_reduction <maximumf>, %65, %cst_23 [1] : vector<16x16xf32> to vector<16xf32>
    %67 = vector.shape_cast %66 : vector<16xf32> to vector<16x1xf32>
    %68 = vector.broadcast %67 : vector<16x1xf32> to vector<16x16xf32>
    %69 = arith.cmpf oge, %65, %68 : vector<16x16xf32>
    %c16_i32_24 = arith.constant 16 : i32
    %70 = vector.broadcast %c16_i32_24 : i32 to vector<16x16xi32>
    %71 = arith.select %69, %17, %70 : vector<16x16xi1>, vector<16x16xi32>
    %cst_25 = arith.constant dense<2147483647> : vector<16xi32>
    %72 = vector.multi_reduction <minsi>, %71, %cst_25 [1] : vector<16x16xi32> to vector<16xi32>
    %73 = vector.shape_cast %72 : vector<16xi32> to vector<16x1xi32>
    %74 = tpu.concatenate %37, %49, %61, %73 in 1 : vector<16x1xi32>, vector<16x1xi32>, vector<16x1xi32>, vector<16x1xi32> -> vector<16x4xi32>
    %c0_26 = arith.constant 0 : index
    %c0_27 = arith.constant 0 : index
    %c0_28 = arith.constant 0 : index
    %75 = vector.load %arg4[%c0_26, %c0_27, %c0_28] : memref<1x16x4xi32, #tpu.memory_space<vmem>>, vector<1x16x4xi32>
    %76 = vector.shape_cast %75 : vector<1x16x4xi32> to vector<16x4xi32>
    %77 = vector.shape_cast %74 : vector<16x4xi32> to vector<1x16x4xi32>
    tpu.vector_store %arg4[%c0_26, %c0_27, %c0_28], %77 {strides = array<i32>} : memref<1x16x4xi32, #tpu.memory_space<vmem>>, vector<1x16x4xi32>,
    return
  }
  func.func @transform_0(%arg0: i32, %arg1: i32) -> (i32, i32, i32) {
    %c0_i32 = arith.constant 0 : i32
    %c0_i32_0 = arith.constant 0 : i32
    return %arg1, %arg0, %c0_i32 : i32, i32, i32
  }
  func.func @transform_1(%arg0: i32, %arg1: i32) -> (i32, i32, i32) {
    %c0_i32 = arith.constant 0 : i32
    %c0_i32_0 = arith.constant 0 : i32
    %c0_i32_1 = arith.constant 0 : i32
    return %arg1, %c0_i32, %c0_i32_0 : i32, i32, i32
  }
  func.func @transform_2(%arg0: i32, %arg1: i32) -> (i32, i32, i32) {
    %c0_i32 = arith.constant 0 : i32
    %c0_i32_0 = arith.constant 0 : i32
    return %arg1, %arg0, %c0_i32 : i32, i32, i32
  }
}

</mosaic_0001>

<llo_original>
// kernel: tpu_custom_call.1
$region0: #{tpu_custom_call.1}
  #allocation0 [shape = 'u32[]', space=smem, size = 0x4, offset = 0x4, fixed_abs, tag = 'smem constant byte address 0x4 - core index']
  #allocation1 [shape = 'u32[144,128]{1,0:T(1,128)}', space=vmem, size = 0x12000, scoped, tag = 'internal scratch']
  %s0 = inlined_call_operand.vmem [shape: f32[2,16,4], index: 0, kind: input, shape index: {}]
  %s1 = inlined_call_operand.vmem [shape: f32[2,4,16], index: 1, kind: input, shape index: {}]
  %s2 = inlined_call_operand.vmem [shape: s32[2,16,4], index: 2, kind: output, shape index: {}]
  %s3 = sld [smem:[#allocation0]]
  $region41: #{tpu_custom_call.1} parent=0
    _
  %s5 = ssub.s32 1, %s3
  %s6 = scalar_select 0, %s5, %s3
  loop: start=0, step=1, limit=4
  $region2: #{tpu_custom_call.1} parent=0 // loop_pre_header
    _
  $region3: #{tpu_custom_call.1} parent=0 // loop_header
    %s8 = sphi 0, %s12
    %p9 = scmp.ge.s32.totalorder %s8, 4
    %s15 = sphi 0, %s27
    %s16 = sphi 0, %s23
    %s17 = sphi 0, %s15
    %s18 = sphi 0, %s16
    %s19 = sphi 0, %s17
    %s20 = sphi 0, %s18
    %s32 = sphi 0, %s34
    %s35 = sphi 0, %s32
    %s36 = sphi 0, %s35
    %s52 = sphi 0, %s36
    %s58 = sphi 0, %s60
    %s61 = sphi 0, %s58
    %s62 = sphi 0, %s61
    %s78 = sphi 0, %s62
    %s86 = sphi 0, %s88
    %s89 = sphi 0, %s86
    %s90 = sphi 0, %s89
    %s106 = sphi 0, %s90
  $region4: #{tpu_custom_call.1} parent=0 // loop_header_branch
    %11 = sbr.rel (%p9) target = $region8
  $region5: #{tpu_custom_call.1} parent=0 // loop_body
    %s13 = ssub.s32 %s8, 1
    %s14 = ssub.s32 %s8, 2
    %s21 = sadd.s32 1, %s16
    %p22 = scmp.ge.s32.totalorder %s21, 2
    %s23 = scalar_select %p22, 0, %s21
    %s24 = sadd.s32 1, %s15
    %s25 = scalar_select %p22, %s24, %s15
    %p26 = scmp.ge.s32.totalorder %s25, 1
    %s27 = scalar_select %p26, 0, %s25
    %s28 = ssub.s32 %s16, %s23
    %s29 = ssub.s32 %s15, %s27
    %s30 = sor.u32 %s28, %s29
    %p31 = scmp.eq.s32.totalorder %s30, 0
    %s33 = sadd.s32 %s32, 1
    %s34 = scalar_select %p31, %s32, %s33
    %p37 = pneg %p31
    %p38 = scmp.eq.s32.totalorder %s8, 1
    %p39 = por %p37, %p38
    %p40 = scmp.ne.s32.totalorder %s32, %s35
    %p41 = scmp.eq.s32.totalorder %s8, 0
    %p42 = por %p40, %p41
    %p43 = scmp.ne.s32.totalorder %s32, %s35
    %p44 = scmp.eq.s32.totalorder %s13, 1
    %p45 = por %p43, %p44
    %p46 = scmp.ne.s32.totalorder %s35, %s36
    %p47 = scmp.eq.s32.totalorder %s13, 0
    %p48 = por %p46, %p47
    %p49 = scmp.ne.s32.totalorder %s35, %s36
    %p50 = scmp.eq.s32.totalorder %s14, 1
    %p51 = por %p49, %p50
    %p53 = scmp.ne.s32.totalorder %s36, %s52
    %p54 = scmp.eq.s32.totalorder %s14, 0
    %p55 = por %p53, %p54
    %s56 = ssub.s32 %s16, %s23
    %p57 = scmp.eq.s32.totalorder %s56, 0
    %s59 = sadd.s32 %s58, 1
    %s60 = scalar_select %p57, %s58, %s59
    %p63 = pneg %p57
    %p64 = scmp.eq.s32.totalorder %s8, 1
    %p65 = por %p63, %p64
    %p66 = scmp.ne.s32.totalorder %s58, %s61
    %p67 = scmp.eq.s32.totalorder %s8, 0
    %p68 = por %p66, %p67
    %p69 = scmp.ne.s32.totalorder %s58, %s61
    %p70 = scmp.eq.s32.totalorder %s13, 1
    %p71 = por %p69, %p70
    %p72 = scmp.ne.s32.totalorder %s61, %s62
    %p73 = scmp.eq.s32.totalorder %s13, 0
    %p74 = por %p72, %p73
    %p75 = scmp.ne.s32.totalorder %s61, %s62
    %p76 = scmp.eq.s32.totalorder %s14, 1
    %p77 = por %p75, %p76
    %p79 = scmp.ne.s32.totalorder %s62, %s78
    %p80 = scmp.eq.s32.totalorder %s14, 0
    %p81 = por %p79, %p80
    %s82 = ssub.s32 %s16, %s23
    %s83 = ssub.s32 %s15, %s27
    %s84 = sor.u32 %s82, %s83
    %p85 = scmp.eq.s32.totalorder %s84, 0
    %s87 = sadd.s32 %s86, 1
    %s88 = scalar_select %p85, %s86, %s87
    %p91 = pneg %p85
    %p92 = scmp.eq.s32.totalorder %s8, 1
    %p93 = por %p91, %p92
    %p94 = scmp.ne.s32.totalorder %s86, %s89
    %p95 = scmp.eq.s32.totalorder %s8, 0
    %p96 = por %p94, %p95
    %p97 = scmp.ne.s32.totalorder %s86, %s89
    %p98 = scmp.eq.s32.totalorder %s13, 1
    %p99 = por %p97, %p98
    %p100 = scmp.ne.s32.totalorder %s89, %s90
    %p101 = scmp.eq.s32.totalorder %s13, 0
    %p102 = por %p100, %p101
    %p103 = scmp.ne.s32.totalorder %s89, %s90
    %p104 = scmp.eq.s32.totalorder %s14, 1
    %p105 = por %p103, %p104
    %p107 = scmp.ne.s32.totalorder %s90, %s106
    %p108 = scmp.eq.s32.totalorder %s14, 0
    %p109 = por %p107, %p108
    %p110 = scmp.le.s32.totalorder 1, %s8
    %p111 = scmp.lt.s32.totalorder %s8, 3
    %p112 = pnand %p110, %p111
    %p113 = pneg %p112
    // Predicated region
    $region9: #{tpu_custom_call.1} parent=5 // pred_check
      _
    $region10: #{tpu_custom_call.1} parent=5 // pred_check_branch
      %115 = sbr.rel (%p112) target = $region12
    $region11: #{tpu_custom_call.1} parent=5 // pred_region
      %s116 = ssub.s32 %s8, 1
    $region12: #{tpu_custom_call.1} parent=5 // pred_fallthru
      _
    %p117 = scmp.lt.s32.totalorder %s8, 2
    // Predicated region
    $region13: #{tpu_custom_call.1} parent=5 // pred_check
      %p118 = pneg %p117
    $region14: #{tpu_custom_call.1} parent=5 // pred_check_branch
      %120 = sbr.rel (%p118) target = $region16
    $region15: #{tpu_custom_call.1} parent=5 // pred_region
      // Predicated region
      $region17: #{tpu_custom_call.1} parent=15 // pred_check
        %p121 = pneg %p42
      $region18: #{tpu_custom_call.1} parent=15 // pred_check_branch
        %123 = sbr.rel (%p121) target = $region20
      $region19: #{tpu_custom_call.1} parent=15 // pred_region
        %s124 = smul.u32 2, %s15
        %p125 = scmp.lt.s32.totalorder %s16, 1
        %s126 = scalar_select %p125, %s16, 1
        %p127 = scmp.lt.s32.totalorder %s124, 1
        %s128 = scalar_select %p127, %s124, 1
        %s129 = smul.addr %s126, 2
        %s130 = sadd.s32 %s128, %s129
        %s131 = smul.addr %s130, 8
        %s132 = scalar_lea.vmem %s0, %s131
        %s133 = smul.u32 2, %s15
      $region20: #{tpu_custom_call.1} parent=15 // pred_fallthru
        _
      // Predicated region
      $region21: #{tpu_custom_call.1} parent=15 // pred_check
        %p134 = pneg %p68
      $region22: #{tpu_custom_call.1} parent=15 // pred_check_branch
        %136 = sbr.rel (%p134) target = $region24
      $region23: #{tpu_custom_call.1} parent=15 // pred_region
        %p137 = scmp.lt.s32.totalorder %s16, 1
        %s138 = scalar_select %p137, %s16, 1
        %s139 = smul.addr %s138, 4
        %s140 = scalar_lea.vmem %s1, %s139
      $region24: #{tpu_custom_call.1} parent=15 // pred_fallthru
        _
    $region16: #{tpu_custom_call.1} parent=5 // pred_fallthru
      _
    %p141 = scmp.le.s32.totalorder 1, %s8
    %p142 = scmp.lt.s32.totalorder %s8, 3
    %p143 = pnand %p141, %p142
    %p144 = pneg %p143
    // Predicated region
    $region25: #{tpu_custom_call.1} parent=5 // pred_check
      _
    $region26: #{tpu_custom_call.1} parent=5 // pred_check_branch
      %146 = sbr.rel (%p143) target = $region28
    $region27: #{tpu_custom_call.1} parent=5 // pred_region
      %s147 = ssub.s32 %s8, 1
      %s148 = smul.u32 2, %s17
      %p149 = scmp.lt.s32.totalorder %s18, 1
      %s150 = scalar_select %p149, %s18, 1
      %p151 = scmp.lt.s32.totalorder %s148, 1
      %s152 = scalar_select %p151, %s148, 1
      %s153 = smul.addr %s150, 2
      %s154 = sadd.s32 %s152, %s153
      %s155 = smul.addr %s154, 8
      %s156 = scalar_lea.vmem %s0, %s155
      %p157 = pneg %p48
      %p158 = pneg %p45
      %p159 = scmp.lt.s32.totalorder %s18, 1
      %s160 = scalar_select %p159, %s18, 1
      %s161 = smul.addr %s160, 4
      %s162 = scalar_lea.vmem %s1, %s161
      %p163 = pneg %p74
      %p164 = pneg %p71
      %p165 = pneg %p102
      %p166 = pneg %p99
      %s167 = smul.u32 2, %s17
      %p168 = scmp.lt.s32.totalorder %s18, 1
      %s169 = scalar_select %p168, %s18, 1
      %p170 = scmp.lt.s32.totalorder %s167, 1
      %s171 = scalar_select %p170, %s167, 1
      %s172 = smul.addr %s169, 2
      %s173 = sadd.s32 %s171, %s172
      %s174 = smul.addr %s173, 8
      %s175 = scalar_lea.vmem %s2, %s174
      %s176 = smul.u32 2, %s17
      %p177 = scmp.lt.s32.totalorder %s18, 1
      %s178 = scalar_select %p177, %s18, 1
      %p179 = scmp.lt.s32.totalorder %s176, 1
      %s180 = scalar_select %p179, %s176, 1
      %s181 = smul.addr %s178, 2
      %s182 = sadd.s32 %s180, %s181
      %s183 = smul.addr %s182, 8
      %s184 = scalar_lea.vmem %s0, %s183
      %s185 = smul.u32 2, %s17
      %p186 = scmp.lt.s32.totalorder %s18, 1
      %s187 = scalar_select %p186, %s18, 1
      %s188 = smul.addr %s187, 4
      %s189 = scalar_lea.vmem %s1, %s188
      %s190 = smul.u32 2, %s17
      %p191 = scmp.lt.s32.totalorder %s18, 1
      %s192 = scalar_select %p191, %s18, 1
      %p193 = scmp.lt.s32.totalorder %s190, 1
      %s194 = scalar_select %p193, %s190, 1
      %s195 = smul.addr %s192, 2
      %s196 = sadd.s32 %s194, %s195
      %s197 = smul.addr %s196, 8
      %s198 = scalar_lea.vmem %s2, %s197
      %s199 = smul.u32 2, %s17
      %v200 = vld [vmem:[%s184] sm:$0xff]
      %v201 = vld [vmem:[%s184 + $0x8] sm:$0xff]
      %v202 = vld [vmem:[%s189] sm:$0xf]
      %vm203 = vcmask 31744
      %v205 = vsel %vm203, %v200, 0
      %v208 = vsel %vm203, %v201, 0
      %vm210 = vcmask 1043456
      %v212 = vsel %vm210, %v202, 0
      %214 = vmatprep.subr.mxu0 0.0
      %215 = vmatpush1.msra.mxu0 0.0
      %216 = vmatprep.subr.mxu0 0.0
      %217 = vmatpush1.msra.mxu0 0.0
      %218 = vmatprep.subr.mxu0 0.0
      %219 = vmatpush1.msra.mxu0 0.0
      %220 = vmatprep.subr.mxu0 0.0
      %221 = vmatpush1.msra.mxu0 0.0
      %222 = vmatprep.subr.mxu0 0.0
      %223 = vmatpush1.msra.mxu0 0.0
      %224 = vmatprep.subr.mxu0 0.0
      %225 = vmatpush1.msra.mxu0 0.0
      %226 = vmatprep.subr.mxu0 0.0
      %227 = vmatpush1.msra.mxu0 0.0
      %228 = vmatprep.subr.mxu0 0.0
      %229 = vmatpush1.msra.mxu0 0.0
      %230 = vmatprep.subr.mxu0 0.0
      %231 = vmatpush1.msra.mxu0 0.0
      %232 = vmatprep.subr.mxu0 0.0
      %233 = vmatpush1.msra.mxu0 0.0
      %234 = vmatprep.subr.mxu0 0.0
      %235 = vmatpush1.msra.mxu0 0.0
      %236 = vmatprep.subr.mxu0 0.0
      %237 = vmatpush1.msra.mxu0 0.0
      %238 = vmatprep.subr.mxu0 0.0
      %239 = vmatpush1.msra.mxu0 0.0
      %240 = vmatprep.subr.mxu0 0.0
      %241 = vmatpush1.msra.mxu0 0.0
      %242 = vmatprep.subr.mxu0 0.0
      %243 = vmatpush1.msra.mxu0 0.0
      %244 = vmatprep.subr.mxu0 0.0
      %245 = vmatpush1.msra.mxu0 %v212
      %246 = vmatprep.subr.mxu0 0.0
      %247 = vmatpush2.msra.mxu0 0.0
      %248 = vmatprep.subr.mxu0 0.0
      %249 = vmatpush2.msra.mxu0 0.0
      %250 = vmatprep.subr.mxu0 0.0
      %251 = vmatpush2.msra.mxu0 0.0
      %252 = vmatprep.subr.mxu0 0.0
      %253 = vmatpush2.msra.mxu0 0.0
      %254 = vmatprep.subr.mxu0 0.0
      %255 = vmatpush2.msra.mxu0 0.0
      %256 = vmatprep.subr.mxu0 0.0
      %257 = vmatpush2.msra.mxu0 0.0
      %258 = vmatprep.subr.mxu0 0.0
      %259 = vmatpush2.msra.mxu0 0.0
      %260 = vmatprep.subr.mxu0 0.0
      %261 = vmatpush2.msra.mxu0 0.0
      %262 = vmatprep.subr.mxu0 0.0
      %263 = vmatpush2.msra.mxu0 0.0
      %264 = vmatprep.subr.mxu0 0.0
      %265 = vmatpush2.msra.mxu0 0.0
      %266 = vmatprep.subr.mxu0 0.0
      %267 = vmatpush2.msra.mxu0 0.0
      %268 = vmatprep.subr.mxu0 0.0
      %269 = vmatpush2.msra.mxu0 0.0
      %270 = vmatprep.subr.mxu0 0.0
      %271 = vmatpush2.msra.mxu0 0.0
      %272 = vmatprep.subr.mxu0 0.0
      %273 = vmatpush2.msra.mxu0 0.0
      %274 = vmatprep.subr.mxu0 0.0
      %275 = vmatpush2.msra.mxu0 0.0
      %276 = vmatprep.subr.mxu0 0.0
      %277 = vmatpush2.msra.mxu0 0.0
      %278 = vmatprep.mubr.f32.mxu0 0.0
      %279 = vmatmul.mubr.f32.gmra.mxu0 %v205
      %v280 = vpop.f32.mrf.mxu0
      %v281 = vadd.f32 0.0, %v280
      %v282 = vpop.f32.mrf.mxu0
      %283 = vmatprep.mubr.f32.mxu0 0.0
      %284 = vmatmul.mubr.f32.gmra.mxu0 %v208
      %v285 = vpop.f32.mrf.mxu0
      %v286 = vadd.f32 0.0, %v285
      %v287 = vpop.f32.mrf.mxu0
      %288 = vdwg.mxu0
      %v289 = vmul.f32 %v200, %v200
      %v290 = vmul.f32 %v201, %v201
      %v291 = vsel %vm203, %v289, 0.0
      %292 = vadd.xlane.f32.xlu0 %v291
      %v293 = vpop.xlane.xlu0 %292
      %v294 = vsel %vm203, %v290, 0.0
      %295 = vadd.xlane.f32.xlu0 %v294
      %v296 = vpop.xlane.xlu0 %295
      %v297 = vmul.f32 %v202, %v202
      %vm298 = vcmask 125952
      %v299 = vsel %vm298, %v297, 0.0
      %v300 = vrot.slane %v299, 4
      %v301 = vadd.f32 %v299, %v300
      %v302 = vrot.slane %v301, 2
      %v303 = vadd.f32 %v301, %v302
      %v304 = vrot.slane %v303, 1
      %v305 = vadd.f32 %v303, %v304
      %v306 = vmul.f32 %v281, 2.0
      %v307 = vmul.f32 %v286, 2.0
      %v308 = vsub.f32 %v306, %v293
      %v309 = vsub.f32 %v307, %v296
      %v310 = vsub.f32 %v308, %v305
      %v311 = vsub.f32 %v309, %v305
      %v312 = vlaneseq
      %v313 = vand.u32 %v312, 127
      %vm314 = vcmask 130048
      %v315 = vsel %vm314, %v310, -inf
      %316 = vmax.xlane.f32.xlu0 %v315
      %v317 = vpop.xlane.xlu0 %316
      %v318 = vsel %vm314, %v311, -inf
      %319 = vmax.xlane.f32.xlu0 %v318
      %v320 = vpop.xlane.xlu0 %319
      %vm321 = vcmp.ge.f32.partialorder %v310, %v317
      %vm322 = vcmp.ge.f32.partialorder %v311, %v320
      %v323 = vsel %vm321, %v313, 16
      %v324 = vsel %vm322, %v313, 16
      %v325 = vsel %vm314, %v323, 2147483647
      %v326 = vand.u32 %v325, 65535
      %v327 = vshra.s32 %v325, 16
      %v328 = vcvt.s32.f32 %v326
      %v329 = vcvt.s32.f32 %v327
      %330 = vmin.xlane.f32.xlu0 %v329
      %v331 = vpop.xlane.xlu0 %330
      %vm332 = vcmp.eq.f32.partialorder %v329, %v331
      %v333 = vsel %vm332, %v328, inf
      %334 = vmin.xlane.f32.xlu0 %v333
      %v335 = vpop.xlane.xlu0 %334
      %v336 = vcvt.f32.s32 %v335
      %v337 = vcvt.f32.s32 %v331
      %v338 = vshll.u32 %v337, 16
      %v339 = vadd.s32 %v338, %v336
      %v340 = vsel %vm314, %v324, 2147483647
      %v341 = vand.u32 %v340, 65535
      %v342 = vshra.s32 %v340, 16
      %v343 = vcvt.s32.f32 %v341
      %v344 = vcvt.s32.f32 %v342
      %345 = vmin.xlane.f32.xlu0 %v344
      %v346 = vpop.xlane.xlu0 %345
      %vm347 = vcmp.eq.f32.partialorder %v344, %v346
      %v348 = vsel %vm347, %v343, inf
      %349 = vmin.xlane.f32.xlu0 %v348
      %v350 = vpop.xlane.xlu0 %349
      %v351 = vcvt.f32.s32 %v350
      %v352 = vcvt.f32.s32 %v346
      %v353 = vshll.u32 %v352, 16
      %v354 = vadd.s32 %v353, %v351
      %vm355 = vcmp.eq.s32.totalorder %v313, %v339
      %vm356 = vcmp.eq.s32.totalorder %v313, %v354
      %v357 = vsel %vm355, -3e+38, %v310
      %v358 = vsel %vm356, -3e+38, %v311
      %v359 = vsel %vm314, %v357, -inf
      %360 = vmax.xlane.f32.xlu0 %v359
      %v361 = vpop.xlane.xlu0 %360
      %v362 = vsel %vm314, %v358, -inf
      %363 = vmax.xlane.f32.xlu0 %v362
      %v364 = vpop.xlane.xlu0 %363
      %vm365 = vcmp.ge.f32.partialorder %v357, %v361
      %vm366 = vcmp.ge.f32.partialorder %v358, %v364
      %v367 = vsel %vm365, %v313, 16
      %v368 = vsel %vm366, %v313, 16
      %v369 = vsel %vm314, %v367, 2147483647
      %v370 = vand.u32 %v369, 65535
      %v371 = vshra.s32 %v369, 16
      %v372 = vcvt.s32.f32 %v370
      %v373 = vcvt.s32.f32 %v371
      %374 = vmin.xlane.f32.xlu0 %v373
      %v375 = vpop.xlane.xlu0 %374
      %vm376 = vcmp.eq.f32.partialorder %v373, %v375
      %v377 = vsel %vm376, %v372, inf
      %378 = vmin.xlane.f32.xlu0 %v377
      %v379 = vpop.xlane.xlu0 %378
      %v380 = vcvt.f32.s32 %v379
      %v381 = vcvt.f32.s32 %v375
      %v382 = vshll.u32 %v381, 16
      %v383 = vadd.s32 %v382, %v380
      %v384 = vsel %vm314, %v368, 2147483647
      %v385 = vand.u32 %v384, 65535
      %v386 = vshra.s32 %v384, 16
      %v387 = vcvt.s32.f32 %v385
      %v388 = vcvt.s32.f32 %v386
      %389 = vmin.xlane.f32.xlu0 %v388
      %v390 = vpop.xlane.xlu0 %389
      %vm391 = vcmp.eq.f32.partialorder %v388, %v390
      %v392 = vsel %vm391, %v387, inf
      %393 = vmin.xlane.f32.xlu0 %v392
      %v394 = vpop.xlane.xlu0 %393
      %v395 = vcvt.f32.s32 %v394
      %v396 = vcvt.f32.s32 %v390
      %v397 = vshll.u32 %v396, 16
      %v398 = vadd.s32 %v397, %v395
      %vm399 = vcmp.eq.s32.totalorder %v313, %v383
      %vm400 = vcmp.eq.s32.totalorder %v313, %v398
      %v401 = vsel %vm399, -3e+38, %v357
      %v402 = vsel %vm400, -3e+38, %v358
      %v403 = vsel %vm314, %v401, -inf
      %404 = vmax.xlane.f32.xlu0 %v403
      %v405 = vpop.xlane.xlu0 %404
      %v406 = vsel %vm314, %v402, -inf
      %407 = vmax.xlane.f32.xlu0 %v406
      %v408 = vpop.xlane.xlu0 %407
      %vm409 = vcmp.ge.f32.partialorder %v401, %v405
      %vm410 = vcmp.ge.f32.partialorder %v402, %v408
      %v411 = vsel %vm409, %v313, 16
      %v412 = vsel %vm410, %v313, 16
      %v413 = vsel %vm314, %v411, 2147483647
      %v414 = vand.u32 %v413, 65535
      %v415 = vshra.s32 %v413, 16
      %v416 = vcvt.s32.f32 %v414
      %v417 = vcvt.s32.f32 %v415
      %418 = vmin.xlane.f32.xlu0 %v417
      %v419 = vpop.xlane.xlu0 %418
      %vm420 = vcmp.eq.f32.partialorder %v417, %v419
      %v421 = vsel %vm420, %v416, inf
      %422 = vmin.xlane.f32.xlu0 %v421
      %v423 = vpop.xlane.xlu0 %422
      %v424 = vcvt.f32.s32 %v423
      %v425 = vcvt.f32.s32 %v419
      %v426 = vshll.u32 %v425, 16
      %v427 = vadd.s32 %v426, %v424
      %v428 = vsel %vm314, %v412, 2147483647
      %v429 = vand.u32 %v428, 65535
      %v430 = vshra.s32 %v428, 16
      %v431 = vcvt.s32.f32 %v429
      %v432 = vcvt.s32.f32 %v430
      %433 = vmin.xlane.f32.xlu0 %v432
      %v434 = vpop.xlane.xlu0 %433
      %vm435 = vcmp.eq.f32.partialorder %v432, %v434
      %v436 = vsel %vm435, %v431, inf
      %437 = vmin.xlane.f32.xlu0 %v436
      %v438 = vpop.xlane.xlu0 %437
      %v439 = vcvt.f32.s32 %v438
      %v440 = vcvt.f32.s32 %v434
      %v441 = vshll.u32 %v440, 16
      %v442 = vadd.s32 %v441, %v439
      %vm443 = vcmp.eq.s32.totalorder %v313, %v427
      %vm444 = vcmp.eq.s32.totalorder %v313, %v442
      %v445 = vsel %vm443, -3e+38, %v401
      %v446 = vsel %vm444, -3e+38, %v402
      %v447 = vsel %vm314, %v445, -inf
      %448 = vmax.xlane.f32.xlu0 %v447
      %v449 = vpop.xlane.xlu0 %448
      %v450 = vsel %vm314, %v446, -inf
      %451 = vmax.xlane.f32.xlu0 %v450
      %v452 = vpop.xlane.xlu0 %451
      %vm453 = vcmp.ge.f32.partialorder %v445, %v449
      %vm454 = vcmp.ge.f32.partialorder %v446, %v452
      %v455 = vsel %vm453, %v313, 16
      %v456 = vsel %vm454, %v313, 16
      %v457 = vsel %vm314, %v455, 2147483647
      %v458 = vand.u32 %v457, 65535
      %v459 = vshra.s32 %v457, 16
      %v460 = vcvt.s32.f32 %v458
      %v461 = vcvt.s32.f32 %v459
      %462 = vmin.xlane.f32.xlu0 %v461
      %v463 = vpop.xlane.xlu0 %462
      %vm464 = vcmp.eq.f32.partialorder %v461, %v463
      %v465 = vsel %vm464, %v460, inf
      %466 = vmin.xlane.f32.xlu0 %v465
      %v467 = vpop.xlane.xlu0 %466
      %v468 = vcvt.f32.s32 %v467
      %v469 = vcvt.f32.s32 %v463
      %v470 = vshll.u32 %v469, 16
      %v471 = vadd.s32 %v470, %v468
      %v472 = vsel %vm314, %v456, 2147483647
      %v473 = vand.u32 %v472, 65535
      %v474 = vshra.s32 %v472, 16
      %v475 = vcvt.s32.f32 %v473
      %v476 = vcvt.s32.f32 %v474
      %477 = vmin.xlane.f32.xlu0 %v476
      %v478 = vpop.xlane.xlu0 %477
      %vm479 = vcmp.eq.f32.partialorder %v476, %v478
      %v480 = vsel %vm479, %v475, inf
      %481 = vmin.xlane.f32.xlu0 %v480
      %v482 = vpop.xlane.xlu0 %481
      %v483 = vcvt.f32.s32 %v482
      %v484 = vcvt.f32.s32 %v478
      %v485 = vshll.u32 %v484, 16
      %v486 = vadd.s32 %v485, %v483
      %vm487 = vcmp.eq.s32.totalorder %v313, %v471
      %vm488 = vcmp.eq.s32.totalorder %v313, %v486
      %v489 = vsel %vm487, -3e+38, %v445
      %v490 = vsel %vm488, -3e+38, %v446
      %v491 = vsel %vm314, %v489, -inf
      %492 = vmax.xlane.f32.xlu0 %v491
      %v493 = vpop.xlane.xlu0 %492
      %v494 = vsel %vm314, %v490, -inf
      %495 = vmax.xlane.f32.xlu0 %v494
      %v496 = vpop.xlane.xlu0 %495
      %vm497 = vcmp.ge.f32.partialorder %v489, %v493
      %vm498 = vcmp.ge.f32.partialorder %v490, %v496
      %v499 = vsel %vm497, %v313, 16
      %v500 = vsel %vm498, %v313, 16
      %v501 = vsel %vm314, %v499, 2147483647
      %v502 = vand.u32 %v501, 65535
      %v503 = vshra.s32 %v501, 16
      %v504 = vcvt.s32.f32 %v502
      %v505 = vcvt.s32.f32 %v503
      %506 = vmin.xlane.f32.xlu0 %v505
      %v507 = vpop.xlane.xlu0 %506
      %vm508 = vcmp.eq.f32.partialorder %v505, %v507
      %v509 = vsel %vm508, %v504, inf
      %510 = vmin.xlane.f32.xlu0 %v509
      %v511 = vpop.xlane.xlu0 %510
      %v512 = vcvt.f32.s32 %v511
      %v513 = vcvt.f32.s32 %v507
      %v514 = vshll.u32 %v513, 16
      %v515 = vadd.s32 %v514, %v512
      %v516 = vsel %vm314, %v500, 2147483647
      %v517 = vand.u32 %v516, 65535
      %v518 = vshra.s32 %v516, 16
      %v519 = vcvt.s32.f32 %v517
      %v520 = vcvt.s32.f32 %v518
      %521 = vmin.xlane.f32.xlu0 %v520
      %v522 = vpop.xlane.xlu0 %521
      %vm523 = vcmp.eq.f32.partialorder %v520, %v522
      %v524 = vsel %vm523, %v519, inf
      %525 = vmin.xlane.f32.xlu0 %v524
      %v526 = vpop.xlane.xlu0 %525
      %v527 = vcvt.f32.s32 %v526
      %v528 = vcvt.f32.s32 %v522
      %v529 = vshll.u32 %v528, 16
      %v530 = vadd.s32 %v529, %v527
      %vm531 = vcmask 7168
      %v532 = vsel %vm531, %v383, %v427
      %v533 = vsel %vm531, %v398, %v442
      %vm534 = vcmask 15360
      %v535 = vsel %vm534, %v532, %v471
      %v536 = vsel %vm534, %v533, %v486
      %vm537 = vcmask 23552
      %v538 = vsel %vm537, %v535, %v515
      %v539 = vsel %vm537, %v536, %v530
      %540 = vst.msk [vmem:[%s198] sm:$0xff] %vm203, %v538
      %541 = vst.msk [vmem:[%s198 + $0x8] sm:$0xff] %vm203, %v539
      %s542 = smul.u32 2, %s17
      %p543 = scmp.lt.s32.totalorder %s18, 1
      %s544 = scalar_select %p543, %s18, 1
      %p545 = scmp.lt.s32.totalorder %s542, 1
      %s546 = scalar_select %p545, %s542, 1
      %s547 = smul.addr %s544, 2
      %s548 = sadd.s32 %s546, %s547
      %s549 = smul.addr %s548, 8
      %s550 = scalar_lea.vmem %s2, %s549
      // Predicated region
      $region29: #{tpu_custom_call.1} parent=27 // pred_check
        %p551 = pneg %p99
      $region30: #{tpu_custom_call.1} parent=27 // pred_check_branch
        %553 = sbr.rel (%p551) target = $region32
      $region31: #{tpu_custom_call.1} parent=27 // pred_region
        %s554 = smul.u32 2, %s17
      $region32: #{tpu_custom_call.1} parent=27 // pred_fallthru
        _
    $region28: #{tpu_custom_call.1} parent=5 // pred_fallthru
      _
    %p555 = scmp.le.s32.totalorder 2, %s8
    // Predicated region
    $region33: #{tpu_custom_call.1} parent=5 // pred_check
      %p556 = pneg %p555
    $region34: #{tpu_custom_call.1} parent=5 // pred_check_branch
      %558 = sbr.rel (%p556) target = $region36
    $region35: #{tpu_custom_call.1} parent=5 // pred_region
      %s559 = ssub.s32 %s8, 2
      // Predicated region
      $region37: #{tpu_custom_call.1} parent=35 // pred_check
        %p560 = pneg %p105
      $region38: #{tpu_custom_call.1} parent=35 // pred_check_branch
        %562 = sbr.rel (%p560) target = $region40
      $region39: #{tpu_custom_call.1} parent=35 // pred_region
        %s563 = smul.u32 2, %s19
        %p564 = scmp.lt.s32.totalorder %s20, 1
        %s565 = scalar_select %p564, %s20, 1
        %p566 = scmp.lt.s32.totalorder %s563, 1
        %s567 = scalar_select %p566, %s563, 1
        %s568 = smul.addr %s565, 2
        %s569 = sadd.s32 %s567, %s568
        %s570 = smul.addr %s569, 8
        %s571 = scalar_lea.vmem %s2, %s570
      $region40: #{tpu_custom_call.1} parent=35 // pred_fallthru
        _
    $region36: #{tpu_custom_call.1} parent=5 // pred_fallthru
      _
  $region6: #{tpu_custom_call.1} parent=0 // loop_footer
    %s12 = sadd.s32 1, %s8
  $region7: #{tpu_custom_call.1} parent=0 // loop_footer_branch
    %7 = sbr.rel target = $region3
  $region8: #{tpu_custom_call.1} parent=0 // loop_exit
    _

</llo_original>
